<compile_context>
chip_gen: v7x
topology: tpu7x:2x2x1
jax: 0.10.0
libtpu: 0.0.40
codegen_flags: <defaults>
</compile_context>

<pallas_src>
import jax
import jax.numpy as jnp
from jax.experimental import pallas as pl
from jax.experimental.pallas import tpu as pltpu

LANE = 128        # vreg lane width
SUB_BF16 = 16     # bf16 sublane rows


def _round_up(x, m):
    return ((x + m - 1) // m) * m


def fusion_kernel(img_ref, aud_ref, w1a_ref, w1b_ref, b1_ref, w2_ref, b2_ref,
                  out_ref):
    """One (TB, C) bf16 batch tile -> one (TB, C) f32 output tile."""
    # First linear: cat([img, aud]) @ W1.T + b1  ==  img@W1a + aud@W1b + b1
    h = jnp.dot(img_ref[...], w1a_ref[...], preferred_element_type=jnp.float32)
    h = h + jnp.dot(aud_ref[...], w1b_ref[...],
                    preferred_element_type=jnp.float32)
    h = h + b1_ref[...]
    h = jnp.maximum(h, 0.0)                       # ReLU, in f32 (VPU)
    # TODO(synk): Dropout(0.3) is inference-mode identity; training mode would
    # need pltpu.prng_seed + pltpu.prng_random_bits masking + 1/(1-p) scaling.
    out = jnp.dot(h.astype(jnp.bfloat16), w2_ref[...],
                  preferred_element_type=jnp.float32)
    out = out + b2_ref[...]
    # Store only the true class width (no 16x padded writeback for small C).
    out_ref[...] = out[:, :out_ref.shape[-1]].astype(out_ref.dtype)


def prepare_fusion_params(w1, b1, w2, b2):
    """One-time parameter preprocessing (hoisted out of the per-forward path).

    PyTorch Linear stores W as (out, in) and computes x @ W.T + b.  We
    pre-transpose, split W1 into image / audio halves, zero-pad the hidden /
    class dimension to a lane-dense multiple (128; 256 when C >= 256 so the
    256-wide v6e/v7x MXU columns stay fed) and cast matmul weights to bf16.
    Zero padding keeps the math exact: padded hidden columns are ReLU(0) = 0
    and the corresponding W2 rows are 0.
    """
    C = w2.shape[0]
    Cp = _round_up(C, 256) if C >= 256 else _round_up(C, LANE)
    w1t = w1.T                                                    # (2C, C)
    w1a = jnp.pad(w1t[:C, :], ((0, 0), (0, Cp - C))).astype(jnp.bfloat16)
    w1b = jnp.pad(w1t[C:, :], ((0, 0), (0, Cp - C))).astype(jnp.bfloat16)
    w2t = jnp.pad(w2.T, ((0, Cp - C), (0, Cp - C))).astype(jnp.bfloat16)
    b1p = jnp.pad(b1.reshape(1, C), ((0, 0), (0, Cp - C))).astype(jnp.float32)
    b2p = jnp.pad(b2.reshape(1, C), ((0, 0), (0, Cp - C))).astype(jnp.float32)
    return (w1a, w1b, b1p, w2t, b2p), C, Cp


def _vmem_budget_bytes():
    """Generation-aware VMEM budget: ~85% of per-core capacity
    (~54 MiB on v7x's 64 MiB, ~108 MiB on v5e/v6e's 128 MiB)."""
    try:
        cap = int(pltpu.get_tpu_info().vmem_capacity_bytes)
    except Exception:
        cap = 64 * 1024 * 1024   # conservative fallback: v7x per-TC VMEM
    return int(cap * 0.85)


def _vmem_estimate(tb, c, cp):
    """Lane-rounded VMEM usage estimate for one grid step."""
    cl = _round_up(c, LANE)
    in_bytes = 2 * 2 * tb * cl * 2            # img + aud tiles, 2 bufs, bf16
    out_bytes = 2 * tb * cl * 4               # output tile, 2 bufs, f32
    w_bytes = (2 * _round_up(c, SUB_BF16) * cp + cp * cp) * 2  # 1-buf bf16 wts
    b_bytes = 2 * 8 * cp * 4                  # biases (sublane-rounded), f32
    interm = tb * cp * (4 + 2 + 4)            # h f32 + h bf16 copy + out f32
    return in_bytes + out_bytes + w_bytes + b_bytes + interm


def _resident_spec(shape):
    """Constant-index (VMEM-resident) block; single-buffered when supported."""
    index_map = lambda i: (0, 0)
    if hasattr(pl, "Buffered"):
        try:
            return pl.BlockSpec(shape, index_map, pipeline_mode=pl.Buffered(1))
        except TypeError:
            pass
    return pl.BlockSpec(shape, index_map)


def fusion_forward(image_pred, audio_pred, params, C, Cp, *, block_b=1024):
    """image_pred, audio_pred: (B, C).  Returns (B, C) f32."""
    w1a, w1b, b1p, w2t, b2p = params
    B = image_pred.shape[0]

    budget = _vmem_budget_bytes()

    # Resident single-buffered weights must fit with healthy headroom.
    w_resident = (2 * C * Cp + Cp * Cp) * 2 + 2 * 8 * Cp * 4
    if w_resident > int(0.7 * budget):
        # TODO(synk): add a K/N-tiled weight-streaming path (an 'arbitrary'
        # grid axis over the hidden dim + f32 VMEM accumulator with
        # pl.when init/finalize) for very large num_classes.
        raise ValueError(
            f"num_classes={C}: resident weights ({w_resident} B) exceed the "
            f"VMEM budget ({budget} B); weight streaming not implemented.")

    # Batch tile: bf16-sublane multiples; force >= 2 grid steps when the batch
    # allows it (v7x megacore); shrink until the VMEM estimate fits.
    B16 = _round_up(B, SUB_BF16)
    TB = min(block_b, B16)
    if B16 >= 2 * SUB_BF16 and B16 // TB < 2:
        TB = _round_up((B16 + 1) // 2, SUB_BF16)
    while TB > SUB_BF16 and _vmem_estimate(TB, C, Cp) > budget:
        TB = max(SUB_BF16, _round_up(TB // 2, SUB_BF16))

    Bp = _round_up(B, TB)

    # Cast activations to bf16 ONCE in the wrapper (halves HBM read traffic;
    # numerically identical to the previous in-kernel cast).
    img = image_pred.astype(jnp.bfloat16)
    aud = audio_pred.astype(jnp.bfloat16)
    if Bp != B:
        pad = ((0, Bp - B), (0, 0))
        img = jnp.pad(img, pad)
        aud = jnp.pad(aud, pad)

    act_spec = pl.BlockSpec((TB, C), lambda i: (i, 0))

    vmem_limit = int(min(budget,
                         max(32 * 1024 * 1024, 2 * _vmem_estimate(TB, C, Cp))))

    cost = pl.CostEstimate(
        flops=6 * B * C * C,                       # 2*B*C*2C + 2*B*C*C
        transcendentals=0,
        bytes_accessed=(2 * B * C * 2              # bf16 activation reads
                        + Bp * C * 4               # f32 output write (true C)
                        + (2 * C + Cp) * Cp * 2    # bf16 weights
                        + 2 * Cp * 4))             # f32 biases

    out = pl.pallas_call(
        fusion_kernel,
        out_shape=jax.ShapeDtypeStruct((Bp, C), jnp.float32),
        grid_spec=pltpu.PrefetchScalarGridSpec(
            num_scalar_prefetch=0,
            grid=(Bp // TB,),
            in_specs=[act_spec,                    # image tile  (bf16)
                      act_spec,                    # audio tile  (bf16)
                      _resident_spec((C, Cp)),     # W1a         (bf16)
                      _resident_spec((C, Cp)),     # W1b         (bf16)
                      _resident_spec((1, Cp)),     # b1          (f32)
                      _resident_spec((Cp, Cp)),    # W2.T        (bf16)
                      _resident_spec((1, Cp))],    # b2          (f32)
            out_specs=pl.BlockSpec((TB, C), lambda i: (i, 0)),
        ),
        compiler_params=pltpu.CompilerParams(
            dimension_semantics=("parallel",),     # megacore-shard batch tiles
            vmem_limit_bytes=vmem_limit),
        cost_estimate=cost,
    )(img, aud, w1a, w1b, b1p, w2t, b2p)

    return out[:B]


def reference_forward(image_pred, audio_pred, w1, b1, w2, b2):
    combined = jnp.concatenate([image_pred, audio_pred], axis=1)
    h = jnp.maximum(combined @ w1.T + b1, 0.0)
    return h @ w2.T + b2


if __name__ == "__main__":
    B = 2              # batch
    C = 8              # num_classes
    key = jax.random.PRNGKey(0)
    k_img, k_aud, k_w1, k_b1, k_w2, k_b2 = jax.random.split(key, 6)

    image_pred = jax.random.normal(k_img, (B, C), dtype=jnp.float32)
    audio_pred = jax.random.normal(k_aud, (B, C), dtype=jnp.float32)

    # Deterministic parameter init (uniform, PyTorch-Linear-style bounds).
    bound1 = 1.0 / jnp.sqrt(2.0 * C)
    w1 = jax.random.uniform(k_w1, (C, 2 * C), jnp.float32, -bound1, bound1)
    b1 = jax.random.uniform(k_b1, (C,), jnp.float32, -bound1, bound1)
    bound2 = 1.0 / jnp.sqrt(1.0 * C)
    w2 = jax.random.uniform(k_w2, (C, C), jnp.float32, -bound2, bound2)
    b2 = jax.random.uniform(k_b2, (C,), jnp.float32, -bound2, bound2)

    # One-time parameter prep (done at model-load time in production).
    params, C_real, Cp = prepare_fusion_params(w1, b1, w2, b2)

    out = fusion_forward(image_pred, audio_pred, params, C_real, Cp)
    out = jax.block_until_ready(out)

    ref = reference_forward(image_pred, audio_pred, w1, b1, w2, b2)
    assert out.shape == (B, C)
    # bf16 matmul operands (f32 accumulation) -> loosened tolerance vs f32 ref.
    assert jnp.allclose(out, ref, atol=5e-2, rtol=5e-2), "mismatch vs reference"

    print("KERNEL_OK")
</pallas_src>

<mosaic_0001>
module attributes {stable_mosaic.version = 11 : i64} {
  func.func @fusion_kernel(%arg0: i32, %arg1: memref<16x8xbf16, #tpu.memory_space<vmem>>, %arg2: memref<16x8xbf16, #tpu.memory_space<vmem>>, %arg3: memref<8x128xbf16, #tpu.memory_space<vmem>>, %arg4: memref<8x128xbf16, #tpu.memory_space<vmem>>, %arg5: memref<1x128xf32, #tpu.memory_space<vmem>>, %arg6: memref<128x128xbf16, #tpu.memory_space<vmem>>, %arg7: memref<1x128xf32, #tpu.memory_space<vmem>>, %arg8: memref<16x8xf32, #tpu.memory_space<vmem>>) attributes {dimension_semantics = [#tpu.dimension_semantics<parallel>], iteration_bounds = array<i64: 1>, scalar_prefetch = 0 : i64, scratch_operands = 0 : i64, tpu.core_type = #tpu.core_type<tc>, window_params = [{transform_indices = @transform_0, window_bounds = array<i64: 16, 8>}, {transform_indices = @transform_1, window_bounds = array<i64: 16, 8>}, {pipeline_mode = #tpu.pipeline_mode<synchronous>, transform_indices = @transform_2, window_bounds = array<i64: 8, 128>}, {pipeline_mode = #tpu.pipeline_mode<synchronous>, transform_indices = @transform_3, window_bounds = array<i64: 8, 128>}, {pipeline_mode = #tpu.pipeline_mode<synchronous>, transform_indices = @transform_4, window_bounds = array<i64: 1, 128>}, {pipeline_mode = #tpu.pipeline_mode<synchronous>, transform_indices = @transform_5, window_bounds = array<i64: 128, 128>}, {pipeline_mode = #tpu.pipeline_mode<synchronous>, transform_indices = @transform_6, window_bounds = array<i64: 1, 128>}, {transform_indices = @transform_7, window_bounds = array<i64: 16, 8>}]} {
    %c0 = arith.constant 0 : index
    %c0_0 = arith.constant 0 : index
    %0 = vector.load %arg1[%c0, %c0_0] : memref<16x8xbf16, #tpu.memory_space<vmem>>, vector<16x8xbf16>
    %c0_1 = arith.constant 0 : index
    %c0_2 = arith.constant 0 : index
    %1 = vector.load %arg3[%c0_1, %c0_2] : memref<8x128xbf16, #tpu.memory_space<vmem>>, vector<8x128xbf16>
    %cst = arith.constant dense<0.000000e+00> : vector<16x128xf32>
    %2 = tpu.matmul %0, %1, %cst {dimension_numbers = #tpu.dot_dimension_numbers<[1], [0], [0], [1], [0, 0, 1, 1], [], []>} : vector<16x8xbf16>, vector<8x128xbf16>, vector<16x128xf32> -> vector<16x128xf32>
    %c0_3 = arith.constant 0 : index
    %c0_4 = arith.constant 0 : index
    %3 = vector.load %arg2[%c0_3, %c0_4] : memref<16x8xbf16, #tpu.memory_space<vmem>>, vector<16x8xbf16>
    %c0_5 = arith.constant 0 : index
    %c0_6 = arith.constant 0 : index
    %4 = vector.load %arg4[%c0_5, %c0_6] : memref<8x128xbf16, #tpu.memory_space<vmem>>, vector<8x128xbf16>
    %cst_7 = arith.constant dense<0.000000e+00> : vector<16x128xf32>
    %5 = tpu.matmul %3, %4, %cst_7 {dimension_numbers = #tpu.dot_dimension_numbers<[1], [0], [0], [1], [0, 0, 1, 1], [], []>} : vector<16x8xbf16>, vector<8x128xbf16>, vector<16x128xf32> -> vector<16x128xf32>
    %6 = arith.addf %2, %5 : vector<16x128xf32>
    %c0_8 = arith.constant 0 : index
    %c0_9 = arith.constant 0 : index
    %7 = vector.load %arg5[%c0_8, %c0_9] : memref<1x128xf32, #tpu.memory_space<vmem>>, vector<1x128xf32>
    %8 = vector.broadcast %7 : vector<1x128xf32> to vector<16x128xf32>
    %9 = arith.addf %6, %8 : vector<16x128xf32>
    %cst_10 = arith.constant 0.000000e+00 : f32
    %10 = vector.broadcast %cst_10 : f32 to vector<16x128xf32>
    %11 = arith.maximumf %9, %10 : vector<16x128xf32>
    %12 = arith.truncf %11 : vector<16x128xf32> to vector<16x128xbf16>
    %c0_11 = arith.constant 0 : index
    %c0_12 = arith.constant 0 : index
    %13 = vector.load %arg6[%c0_11, %c0_12] : memref<128x128xbf16, #tpu.memory_space<vmem>>, vector<128x128xbf16>
    %cst_13 = arith.constant dense<0.000000e+00> : vector<16x128xf32>
    %14 = tpu.matmul %12, %13, %cst_13 {dimension_numbers = #tpu.dot_dimension_numbers<[1], [0], [0], [1], [0, 0, 1, 1], [], []>} : vector<16x128xbf16>, vector<128x128xbf16>, vector<16x128xf32> -> vector<16x128xf32>
    %c0_14 = arith.constant 0 : index
    %c0_15 = arith.constant 0 : index
    %15 = vector.load %arg7[%c0_14, %c0_15] : memref<1x128xf32, #tpu.memory_space<vmem>>, vector<1x128xf32>
    %16 = vector.broadcast %15 : vector<1x128xf32> to vector<16x128xf32>
    %17 = arith.addf %14, %16 : vector<16x128xf32>
    %18 = vector.extract_strided_slice %17 {offsets = [0, 0], sizes = [16, 8], strides = [1, 1]} : vector<16x128xf32> to vector<16x8xf32>
    %c0_16 = arith.constant 0 : index
    %c0_17 = arith.constant 0 : index
    %19 = vector.load %arg8[%c0_16, %c0_17] : memref<16x8xf32, #tpu.memory_space<vmem>>, vector<16x8xf32>
    tpu.vector_store %arg8[%c0_16, %c0_17], %18 {strides = array<i32>} : memref<16x8xf32, #tpu.memory_space<vmem>>, vector<16x8xf32>,
    return
  }
  func.func @transform_0(%arg0: i32) -> (i32, i32) {
    %c0_i32 = arith.constant 0 : i32
    %c0_i32_0 = arith.constant 0 : i32
    return %arg0, %c0_i32 : i32, i32
  }
  func.func @transform_1(%arg0: i32) -> (i32, i32) {
    %c0_i32 = arith.constant 0 : i32
    %c0_i32_0 = arith.constant 0 : i32
    return %arg0, %c0_i32 : i32, i32
  }
  func.func @transform_2(%arg0: i32) -> (i32, i32) {
    %c0_i32 = arith.constant 0 : i32
    %c0_i32_0 = arith.constant 0 : i32
    %c0_i32_1 = arith.constant 0 : i32
    return %c0_i32, %c0_i32_0 : i32, i32
  }
  func.func @transform_3(%arg0: i32) -> (i32, i32) {
    %c0_i32 = arith.constant 0 : i32
    %c0_i32_0 = arith.constant 0 : i32
    %c0_i32_1 = arith.constant 0 : i32
    return %c0_i32, %c0_i32_0 : i32, i32
  }
  func.func @transform_4(%arg0: i32) -> (i32, i32) {
    %c0_i32 = arith.constant 0 : i32
    %c0_i32_0 = arith.constant 0 : i32
    %c0_i32_1 = arith.constant 0 : i32
    return %c0_i32, %c0_i32_0 : i32, i32
  }
  func.func @transform_5(%arg0: i32) -> (i32, i32) {
    %c0_i32 = arith.constant 0 : i32
    %c0_i32_0 = arith.constant 0 : i32
    %c0_i32_1 = arith.constant 0 : i32
    return %c0_i32, %c0_i32_0 : i32, i32
  }
  func.func @transform_6(%arg0: i32) -> (i32, i32) {
    %c0_i32 = arith.constant 0 : i32
    %c0_i32_0 = arith.constant 0 : i32
    %c0_i32_1 = arith.constant 0 : i32
    return %c0_i32, %c0_i32_0 : i32, i32
  }
  func.func @transform_7(%arg0: i32) -> (i32, i32) {
    %c0_i32 = arith.constant 0 : i32
    %c0_i32_0 = arith.constant 0 : i32
    return %arg0, %c0_i32 : i32, i32
  }
}

</mosaic_0001>

<llo_original>
// kernel: tpu_custom_call.1
$region0: #{tpu_custom_call.1}
  #allocation0 [shape = 'u32[]', space=smem, size = 0x4, offset = 0x4, fixed_abs, tag = 'smem constant byte address 0x4 - core index']
  #allocation1 [shape = 'u32[144,128]{1,0:T(1,128)}', space=vmem, size = 0x12000, scoped, tag = 'internal scratch']
  %s0 = inlined_call_operand.vmem [shape: bf16[16,8], index: 0, kind: input, shape index: {}]
  %s1 = inlined_call_operand.vmem [shape: bf16[16,8], index: 1, kind: input, shape index: {}]
  %s2 = inlined_call_operand.vmem [shape: bf16[8,128], index: 2, kind: input, shape index: {}]
  %s3 = inlined_call_operand.vmem [shape: bf16[8,128], index: 3, kind: input, shape index: {}]
  %s4 = inlined_call_operand.vmem [shape: f32[1,128], index: 4, kind: input, shape index: {}]
  %s5 = inlined_call_operand.hbm [shape: bf16[128,128], index: 5, kind: input, shape index: {}]
  %s6 = inlined_call_operand.vmem [shape: f32[1,128], index: 6, kind: input, shape index: {}]
  %s7 = inlined_call_operand.vmem [shape: f32[16,8], index: 7, kind: output, shape index: {}]
  %s8 = sld [smem:[#allocation0]]
  $region42: #{tpu_custom_call.1} parent=0
    _
  %s10 = ssub.s32 1, %s8
  %s11 = scalar_select 0, %s10, %s8
  $region1: #{tpu_custom_call.1} parent=0
    #allocation2 [shape = 'u8[32768]{0}', space=vmem, size = 0x8000, scoped, tag = 'input window, operand 5, single buffered']
    #allocation3 [shape = 's32[1]{0}', space=sflag, size = 0x4, scoped, tag = 'scoped memory for tpu_custom_call.1']
    %12 = vsyncpa [#allocation3], 0
    // Predicated region
    $region2: #{tpu_custom_call.1} parent=1 // pred_check
      _
    $region3: #{tpu_custom_call.1} parent=1 // pred_check_branch
      %14 = sbr.rel (0) target = $region5
    $region4: #{tpu_custom_call.1} parent=1 // pred_region
      _
    $region5: #{tpu_custom_call.1} parent=1 // pred_fallthru
      _
    // Predicated region
    $region6: #{tpu_custom_call.1} parent=1 // pred_check
      _
    $region7: #{tpu_custom_call.1} parent=1 // pred_check_branch
      %16 = sbr.rel (0) target = $region9
    $region8: #{tpu_custom_call.1} parent=1 // pred_region
      _
    $region9: #{tpu_custom_call.1} parent=1 // pred_fallthru
      _
    // Predicated region
    $region10: #{tpu_custom_call.1} parent=1 // pred_check
      _
    $region11: #{tpu_custom_call.1} parent=1 // pred_check_branch
      %18 = sbr.rel (0) target = $region13
    $region12: #{tpu_custom_call.1} parent=1 // pred_region
      _
    $region13: #{tpu_custom_call.1} parent=1 // pred_fallthru
      _
    // Predicated region
    $region14: #{tpu_custom_call.1} parent=1 // pred_check
      _
    $region15: #{tpu_custom_call.1} parent=1 // pred_check_branch
      %20 = sbr.rel (0) target = $region17
    $region16: #{tpu_custom_call.1} parent=1 // pred_region
      _
    $region17: #{tpu_custom_call.1} parent=1 // pred_fallthru
      _
    // Predicated region
    $region18: #{tpu_custom_call.1} parent=1 // pred_check
      _
    $region19: #{tpu_custom_call.1} parent=1 // pred_check_branch
      %22 = sbr.rel (0) target = $region21
    $region20: #{tpu_custom_call.1} parent=1 // pred_region
      _
    $region21: #{tpu_custom_call.1} parent=1 // pred_fallthru
      _
    // Predicated region
    $region22: #{tpu_custom_call.1} parent=1 // pred_check
      _
    $region23: #{tpu_custom_call.1} parent=1 // pred_check_branch
      %24 = sbr.rel (0) target = $region25
    $region24: #{tpu_custom_call.1} parent=1 // pred_region
      %s26 = ssub.s32 1024, 1024
      %27 = vsyncadd [#allocation3], %s26
      %s28 = sshll.u32 [#allocation2], 4
      %s29 = int_to_ptr.vmem [resolvable:$true] %s28
      %34 = dma.hbm_to_vmem [thread:$0]  %s5, 1024, %s29, [#allocation3], 64, 64, 4
    $region25: #{tpu_custom_call.1} parent=1 // pred_fallthru
      _
    // Predicated region
    $region26: #{tpu_custom_call.1} parent=1 // pred_check
      _
    $region27: #{tpu_custom_call.1} parent=1 // pred_check_branch
      %36 = sbr.rel (0) target = $region29
    $region28: #{tpu_custom_call.1} parent=1 // pred_region
      _
    $region29: #{tpu_custom_call.1} parent=1 // pred_fallthru
      _
    // Predicated region
    $region30: #{tpu_custom_call.1} parent=1 // pred_check
      _
    $region31: #{tpu_custom_call.1} parent=1 // pred_check_branch
      %38 = sbr.rel (0) target = $region33
    $region32: #{tpu_custom_call.1} parent=1 // pred_region
      %39 = dma.done [#allocation3], 1024
    $region33: #{tpu_custom_call.1} parent=1 // pred_fallthru
      _
    %v41 = vld [vmem:[%s0] sm:$0xf]
    %v42 = vld [vmem:[%s0 + $0x4] sm:$0xf]
    %v43 = vld [vmem:[%s2] sm:$0xf]
    %v44 = vld [vmem:[%s1] sm:$0xf]
    %v45 = vld [vmem:[%s1 + $0x4] sm:$0xf]
    %v46 = vld [vmem:[%s3] sm:$0xf]
    %v49 = vunpack.c.l.b16 %v44
    %v50 = vunpack.c.l.b16 %v45
    %v51 = vpack.c.b16 %v50, %v49
    %vm52 = vcmask 64512
    %v54 = vsel %vm52, %v51, 0
    %vm56 = vcmask 1043456
    %v58 = vsel %vm56, %v46, 0
    %60 = vmatprep.subr.bf16.mxu0 0
    %61 = vmatpush1.bf16.msra.mxu0 %v58
    %62 = vmatprep.subr.bf16.mxu0 0
    %63 = vmatpush1.bf16.msra.mxu0 0
    %64 = vmatprep.subr.bf16.mxu0 0
    %65 = vmatpush1.bf16.msra.mxu0 0
    %66 = vmatprep.subr.bf16.mxu0 0
    %67 = vmatpush1.bf16.msra.mxu0 0
    %68 = vmatprep.subr.bf16.mxu0 0
    %69 = vmatpush1.bf16.msra.mxu0 0
    %70 = vmatprep.subr.bf16.mxu0 0
    %71 = vmatpush1.bf16.msra.mxu0 0
    %72 = vmatprep.subr.bf16.mxu0 0
    %73 = vmatpush1.bf16.msra.mxu0 0
    %74 = vmatprep.subr.bf16.mxu0 0
    %75 = vmatpush1.bf16.msra.mxu0 0
    %76 = vmatprep.subr.bf16.mxu0 0
    %77 = vmatpush1.bf16.msra.mxu0 0
    %78 = vmatprep.subr.bf16.mxu0 0
    %79 = vmatpush1.bf16.msra.mxu0 0
    %80 = vmatprep.subr.bf16.mxu0 0
    %81 = vmatpush1.bf16.msra.mxu0 0
    %82 = vmatprep.subr.bf16.mxu0 0
    %83 = vmatpush1.bf16.msra.mxu0 0
    %84 = vmatprep.subr.bf16.mxu0 0
    %85 = vmatpush1.bf16.msra.mxu0 0
    %86 = vmatprep.subr.bf16.mxu0 0
    %87 = vmatpush1.bf16.msra.mxu0 0
    %88 = vmatprep.subr.bf16.mxu0 0
    %89 = vmatpush1.bf16.msra.mxu0 0
    %90 = vmatprep.subr.bf16.mxu0 0
    %91 = vmatpush1.bf16.msra.mxu0 0
    %92 = vmatprep.mubr.bf16.mxu0 0
    %93 = vmatmul.mubr.bf16.gmra.mrb[0].mxu0 %v54
    %v94 = vpop.f32.mrb[0].mxu0
    %v95 = vadd.f32 0.0, %v94
    %v96 = vpop.f32.mrb[0].mxu0
    %v97 = vpop.f32.mrb[0].mxu0
    %v98 = vadd.f32 0.0, %v97
    %v99 = vpop.f32.mrb[0].mxu0
    %100 = vdwg.mxu0
    %v103 = vunpack.c.l.b16 %v41
    %v104 = vunpack.c.l.b16 %v42
    %v105 = vpack.c.b16 %v104, %v103
    %v107 = vsel %vm52, %v105, 0
    %v110 = vsel %vm56, %v43, 0
    %112 = vmatprep.subr.bf16.mxu0 0
    %113 = vmatpush1.bf16.msra.mxu0 %v110
    %114 = vmatprep.subr.bf16.mxu0 0
    %115 = vmatpush1.bf16.msra.mxu0 0
    %116 = vmatprep.subr.bf16.mxu0 0
    %117 = vmatpush1.bf16.msra.mxu0 0
    %118 = vmatprep.subr.bf16.mxu0 0
    %119 = vmatpush1.bf16.msra.mxu0 0
    %120 = vmatprep.subr.bf16.mxu0 0
    %121 = vmatpush1.bf16.msra.mxu0 0
    %122 = vmatprep.subr.bf16.mxu0 0
    %123 = vmatpush1.bf16.msra.mxu0 0
    %124 = vmatprep.subr.bf16.mxu0 0
    %125 = vmatpush1.bf16.msra.mxu0 0
    %126 = vmatprep.subr.bf16.mxu0 0
    %127 = vmatpush1.bf16.msra.mxu0 0
    %128 = vmatprep.subr.bf16.mxu0 0
    %129 = vmatpush1.bf16.msra.mxu0 0
    %130 = vmatprep.subr.bf16.mxu0 0
    %131 = vmatpush1.bf16.msra.mxu0 0
    %132 = vmatprep.subr.bf16.mxu0 0
    %133 = vmatpush1.bf16.msra.mxu0 0
    %134 = vmatprep.subr.bf16.mxu0 0
    %135 = vmatpush1.bf16.msra.mxu0 0
    %136 = vmatprep.subr.bf16.mxu0 0
    %137 = vmatpush1.bf16.msra.mxu0 0
    %138 = vmatprep.subr.bf16.mxu0 0
    %139 = vmatpush1.bf16.msra.mxu0 0
    %140 = vmatprep.subr.bf16.mxu0 0
    %141 = vmatpush1.bf16.msra.mxu0 0
    %142 = vmatprep.subr.bf16.mxu0 0
    %143 = vmatpush1.bf16.msra.mxu0 0
    %144 = vmatprep.mubr.bf16.mxu0 0
    %145 = vmatmul.mubr.bf16.gmra.mrb[0].mxu0 %v107
    %v146 = vpop.f32.mrb[0].mxu0
    %v147 = vadd.f32 %v95, %v146
    %v148 = vpop.f32.mrb[0].mxu0
    %v149 = vpop.f32.mrb[0].mxu0
    %v150 = vadd.f32 %v98, %v149
    %v151 = vpop.f32.mrb[0].mxu0
    %152 = vdwg.mxu0
    %v153 = vld [vmem:[%s4] sm:$0x1]
    %v155 = vlaneseq
    %v156 = vshrl.u32 %v155, 7
    %v157 = vsub.s32 0, %v156
    %v158 = vrot.slane %v153, %v157
    %v160 = vadd.f32 %v147, %v158
    %v161 = vadd.f32 %v150, %v158
    %v162 = vmax.f32 %v160, 0.0
    %v163 = vmax.f32 %v161, 0.0
    %v164 = vpack.c.bf16 %v163, %v162
    %v165 = vld [vmem:[#allocation2] sm:$0xf]
    %v166 = vld [vmem:[#allocation2 + $0x4] sm:$0xf]
    %v167 = vld [vmem:[#allocation2 + $0x8] sm:$0xf]
    %v168 = vld [vmem:[#allocation2 + $0xc] sm:$0xf]
    %v169 = vld [vmem:[#allocation2 + $0x10] sm:$0xf]
    %v170 = vld [vmem:[#allocation2 + $0x14] sm:$0xf]
    %v171 = vld [vmem:[#allocation2 + $0x18] sm:$0xf]
    %v172 = vld [vmem:[#allocation2 + $0x1c] sm:$0xf]
    %v173 = vld [vmem:[#allocation2 + $0x20] sm:$0xf]
    %v174 = vld [vmem:[#allocation2 + $0x24] sm:$0xf]
    %v175 = vld [vmem:[#allocation2 + $0x28] sm:$0xf]
    %v176 = vld [vmem:[#allocation2 + $0x2c] sm:$0xf]
    %v177 = vld [vmem:[#allocation2 + $0x30] sm:$0xf]
    %v178 = vld [vmem:[#allocation2 + $0x34] sm:$0xf]
    %v179 = vld [vmem:[#allocation2 + $0x38] sm:$0xf]
    %v180 = vld [vmem:[#allocation2 + $0x3c] sm:$0xf]
    %v181 = vld [vmem:[%s6] sm:$0x1]
    %v183 = vlaneseq
    %v184 = vshrl.u32 %v183, 7
    %v185 = vsub.s32 0, %v184
    %v186 = vrot.slane %v181, %v185
    %v204 = vunpack.c.l.b16 %v165
    %v205 = vunpack.c.l.b16 %v166
    %v206 = vunpack.c.l.b16 %v167
    %v207 = vunpack.c.l.b16 %v168
    %v208 = vunpack.c.l.b16 %v169
    %v209 = vunpack.c.l.b16 %v170
    %v210 = vunpack.c.l.b16 %v171
    %v211 = vunpack.c.l.b16 %v172
    %v212 = vunpack.c.l.b16 %v173
    %v213 = vunpack.c.l.b16 %v174
    %v214 = vunpack.c.l.b16 %v175
    %v215 = vunpack.c.l.b16 %v176
    %v216 = vunpack.c.l.b16 %v177
    %v217 = vunpack.c.l.b16 %v178
    %v218 = vunpack.c.l.b16 %v179
    %v219 = vunpack.c.l.b16 %v180
    %v220 = vpack.c.b16 %v205, %v204
    %v221 = vpack.c.b16 %v207, %v206
    %v222 = vpack.c.b16 %v209, %v208
    %v223 = vpack.c.b16 %v211, %v210
    %v224 = vpack.c.b16 %v213, %v212
    %v225 = vpack.c.b16 %v215, %v214
    %v226 = vpack.c.b16 %v217, %v216
    %v227 = vpack.c.b16 %v219, %v218
    %236 = vmatprep.subr.bf16.mxu0 0
    %237 = vmatpush1.bf16.msra.mxu0 %v220
    %238 = vmatprep.subr.bf16.mxu0 0
    %239 = vmatpush1.bf16.msra.mxu0 %v221
    %240 = vmatprep.subr.bf16.mxu0 0
    %241 = vmatpush1.bf16.msra.mxu0 %v222
    %242 = vmatprep.subr.bf16.mxu0 0
    %243 = vmatpush1.bf16.msra.mxu0 %v223
    %244 = vmatprep.subr.bf16.mxu0 0
    %245 = vmatpush1.bf16.msra.mxu0 %v224
    %246 = vmatprep.subr.bf16.mxu0 0
    %247 = vmatpush1.bf16.msra.mxu0 %v225
    %248 = vmatprep.subr.bf16.mxu0 0
    %249 = vmatpush1.bf16.msra.mxu0 %v226
    %250 = vmatprep.subr.bf16.mxu0 0
    %251 = vmatpush1.bf16.msra.mxu0 %v227
    %252 = vmatprep.subr.bf16.mxu0 0
    %253 = vmatpush1.bf16.msra.mxu0 0
    %254 = vmatprep.subr.bf16.mxu0 0
    %255 = vmatpush1.bf16.msra.mxu0 0
    %256 = vmatprep.subr.bf16.mxu0 0
    %257 = vmatpush1.bf16.msra.mxu0 0
    %258 = vmatprep.subr.bf16.mxu0 0
    %259 = vmatpush1.bf16.msra.mxu0 0
    %260 = vmatprep.subr.bf16.mxu0 0
    %261 = vmatpush1.bf16.msra.mxu0 0
    %262 = vmatprep.subr.bf16.mxu0 0
    %263 = vmatpush1.bf16.msra.mxu0 0
    %264 = vmatprep.subr.bf16.mxu0 0
    %265 = vmatpush1.bf16.msra.mxu0 0
    %266 = vmatprep.subr.bf16.mxu0 0
    %267 = vmatpush1.bf16.msra.mxu0 0
    %268 = vmatprep.mubr.bf16.mxu0 0
    %269 = vmatmul.mubr.bf16.gmra.mrb[0].mxu0 %v164
    %v270 = vpop.f32.mrb[0].mxu0
    %v271 = vadd.f32 %v186, %v270
    %v272 = vpop.f32.mrb[0].mxu0
    %v273 = vpop.f32.mrb[0].mxu0
    %v274 = vadd.f32 %v186, %v273
    %v275 = vpop.f32.mrb[0].mxu0
    %276 = vdwg.mxu0
    %277 = vst.msk [vmem:[%s7] sm:$0xff] %vm52, %v271
    %278 = vst.msk [vmem:[%s7 + $0x8] sm:$0xff] %vm52, %v274
    // Predicated region
    $region34: #{tpu_custom_call.1} parent=1 // pred_check
      _
    $region35: #{tpu_custom_call.1} parent=1 // pred_check_branch
      %280 = sbr.rel (0) target = $region37
    $region36: #{tpu_custom_call.1} parent=1 // pred_region
      _
    $region37: #{tpu_custom_call.1} parent=1 // pred_fallthru
      _
    // Predicated region
    $region38: #{tpu_custom_call.1} parent=1 // pred_check
      _
    $region39: #{tpu_custom_call.1} parent=1 // pred_check_branch
      %282 = sbr.rel (0) target = $region41
    $region40: #{tpu_custom_call.1} parent=1 // pred_region
      _
    $region41: #{tpu_custom_call.1} parent=1 // pred_fallthru
      _
    %283 = vsyncpa [#allocation3], 1

</llo_original>
